<compile_context>
chip_gen: v5e
topology: v5e:2x2
jax: 0.10.0
libtpu: 0.0.40
codegen_flags: <defaults>
</compile_context>

<pallas_src>
import functools

import jax
import jax.numpy as jnp
from jax.experimental import pallas as pl
from jax.experimental.pallas import tpu as pltpu

HIDDEN = 128
_LANE = 128
_NEG_INF = -1e30  # bias for padded logit columns -> exp underflows to exactly 0


def _round_up(x, m):
    return (x + m - 1) // m * m


def _default_fc1_dtype():
    """bf16 fc1 streaming/math on chips with a bf16 VALU (v6e/v7x); f32 elsewhere (v5e & older)."""
    try:
        kind = jax.devices()[0].device_kind.lower()
    except Exception:
        return "float32"
    if any(tag in kind for tag in ("v6", "v7", "6e", "7x")):
        return "bfloat16"
    return "float32"


def _default_block_b(batch, fc1_dtype):
    # bf16 packs 16 rows per sublane tile; keep batch tiles aligned to the packing.
    row_align = 16 if jnp.dtype(fc1_dtype) == jnp.dtype(jnp.bfloat16) else 8
    max_tb = 2048  # per-step footprint is single-digit MiB even double-buffered (v7x 64 MiB VMEM OK)
    if batch <= row_align:
        return row_align
    # Split into >=2 grid steps so v7x's two TensorCores both get a share of the batch.
    half = -(-batch // 2)
    return min(max_tb, _round_up(half, row_align))


def policy_kernel(x_ref, w1_ref, b1_ref, w2_ref, b2_ref, o_ref):
    """One batch tile: fc1 -> ReLU -> fc2 -> softmax, fully fused. Output is lane-dense."""
    x = x_ref[...]                          # [TB, S]  (f32, or bf16 on v6e/v7x)
    tb, s = x.shape
    w1 = w1_ref[...]                        # [S, HIDDEN] same dtype as x
    hidden = w1.shape[1]

    if s <= 8:
        # Tiny contraction (e.g. state_size=4 for CartPole): an MXU matmul would waste the
        # 128/256-deep systolic contraction; do `s` broadcast multiply-adds on the VPU instead.
        # bf16 multiplies (v6e/v7x) double VPU throughput; accumulation stays in f32.
        # TODO(synk): if bundle dumps show the per-k lane-extract/broadcast (XLU) saturating
        # before the VALU at large block_b, revisit this loop's formulation.
        h = jnp.broadcast_to(b1_ref[...], (tb, hidden))            # f32 accumulator
        for k in range(s):                                         # static unroll
            h = h + (x[:, k:k + 1] * w1[k:k + 1, :]).astype(jnp.float32)
    else:
        h = jnp.dot(x, w1, preferred_element_type=jnp.float32) + b1_ref[...]
    h = jnp.maximum(h, 0.0)                 # ReLU

    # fc2: 128-deep contraction with a lane-dense (128-wide) N -> MXU.
    logits = jnp.dot(h, w2_ref[...], preferred_element_type=jnp.float32) + b2_ref[...]

    # Numerically stable softmax over the last dim.  Padded action columns carry a -1e30 bias,
    # so exp() underflows to 0 and they contribute nothing to the sum.  Reciprocal -> EUP
    # (exact, not approx, so row sums stay within 1e-5 of 1).
    m = jnp.max(logits, axis=-1, keepdims=True)
    e = jnp.exp(logits - m)
    denom = jnp.sum(e, axis=-1, keepdims=True)
    o_ref[...] = (e * pl.reciprocal(denom)).astype(o_ref.dtype)


@functools.partial(jax.jit,
                   static_argnames=("block_b", "fc1_dtype", "single_buffer_weights"))
def _policy_forward_impl(x, w1, b1, w2, b2, *, block_b, fc1_dtype, single_buffer_weights):
    B, S = x.shape
    A = w2.shape[1]
    fc1_dt = jnp.dtype(fc1_dtype)

    # --- lane-dense output: zero-pad w2's action dim to a multiple of 128; push padded logit
    # columns to -1e30 via b2 so the softmax ignores them.  Turns masked vst.msk partial stores
    # into full unmasked stores and gives fc2 a natural 128-wide MXU N.
    A_pad = _round_up(max(A, 1), _LANE)
    if A_pad != A:
        w2 = jnp.pad(w2, ((0, 0), (0, A_pad - A)))
        b2 = jnp.pad(b2, ((0, 0), (0, A_pad - A)), constant_values=_NEG_INF)

    # --- fc1 streaming / math dtype (bf16 on v6e/v7x; f32 elsewhere).
    if x.dtype != fc1_dt:
        x = x.astype(fc1_dt)
        w1 = w1.astype(fc1_dt)

    # --- batch tiling (pad to whole tiles; padded rows sliced off below).
    row_align = 16 if fc1_dt == jnp.dtype(jnp.bfloat16) else 8
    block_b = _round_up(block_b, row_align)
    Bp = _round_up(B, block_b)
    if Bp != B:
        x = jnp.pad(x, ((0, Bp - B), (0, 0)))
    grid = (Bp // block_b,)

    cost = pl.CostEstimate(
        flops=2 * Bp * (S * HIDDEN + HIDDEN * A_pad),
        transcendentals=Bp * A_pad,
        bytes_accessed=(x.dtype.itemsize * (Bp * S + S * HIDDEN)
                        + 4 * (Bp * A_pad + HIDDEN + HIDDEN * A_pad + A_pad)),
    )

    # Constant-index weight/bias blocks never change -> single buffer is enough.
    if single_buffer_weights:
        def const_spec(shape):
            return pl.BlockSpec(shape, lambda i: (0, 0), pipeline_mode=pl.Buffered(1))
    else:
        def const_spec(shape):
            return pl.BlockSpec(shape, lambda i: (0, 0))

    out = pl.pallas_call(
        policy_kernel,
        out_shape=jax.ShapeDtypeStruct((Bp, A_pad), jnp.float32),
        grid=grid,
        in_specs=[
            pl.BlockSpec((block_b, S), lambda i: (i, 0)),   # x: batch-tiled, pipelined
            const_spec((S, HIDDEN)),                        # w1: VMEM-resident
            const_spec((1, HIDDEN)),                        # b1: VMEM-resident
            const_spec((HIDDEN, A_pad)),                    # w2: VMEM-resident, lane-padded
            const_spec((1, A_pad)),                         # b2: VMEM-resident, lane-padded
        ],
        out_specs=pl.BlockSpec((block_b, A_pad), lambda i: (i, 0)),
        compiler_params=pltpu.CompilerParams(
            dimension_semantics=("parallel",),              # shard batch tiles over v7x's 2 TCs
        ),
        cost_estimate=cost,
    )(x, w1, b1, w2, b2)

    return out[:B, :A]


def policy_forward(x, w1, b1, w2, b2, *, block_b=None, fc1_dtype=None):
    """x: [B, S]; w1: [S, 128]; b1: [1, 128]; w2: [128, A]; b2: [1, A] -> probs [B, A]."""
    if fc1_dtype is None:
        fc1_dtype = _default_fc1_dtype()
    if block_b is None:
        block_b = _default_block_b(x.shape[0], fc1_dtype)
    try:
        return _policy_forward_impl(x, w1, b1, w2, b2, block_b=block_b,
                                    fc1_dtype=fc1_dtype, single_buffer_weights=True)
    except Exception:
        # pl.Buffered(1) support can vary across jax versions; default buffering is equivalent
        # in behavior (constant block indices are not re-DMA'd), just keeps a spare buffer.
        return _policy_forward_impl(x, w1, b1, w2, b2, block_b=block_b,
                                    fc1_dtype=fc1_dtype, single_buffer_weights=False)


def init_params(key, state_size, action_size):
    # Deterministic synthetic init mimicking nn.Linear's uniform(-1/sqrt(fan_in), +).
    k1, k2, k3, k4 = jax.random.split(key, 4)
    bound1 = 1.0 / jnp.sqrt(state_size)
    bound2 = 1.0 / jnp.sqrt(HIDDEN)
    w1 = jax.random.uniform(k1, (state_size, HIDDEN), jnp.float32, -bound1, bound1)
    b1 = jax.random.uniform(k2, (1, HIDDEN), jnp.float32, -bound1, bound1)
    w2 = jax.random.uniform(k3, (HIDDEN, action_size), jnp.float32, -bound2, bound2)
    b2 = jax.random.uniform(k4, (1, action_size), jnp.float32, -bound2, bound2)
    return w1, b1, w2, b2


if __name__ == "__main__":
    state_size = 4    # e.g. CartPole observation dim
    action_size = 2   # e.g. CartPole action dim
    batch = 40        # ragged vs. the auto-chosen tile -> exercises padding + a 2-step grid

    key = jax.random.PRNGKey(0)
    kx, kp = jax.random.split(key)
    x = jax.random.normal(kx, (batch, state_size), jnp.float32)
    w1, b1, w2, b2 = init_params(kp, state_size, action_size)

    fc1_dtype = _default_fc1_dtype()
    probs = policy_forward(x, w1, b1, w2, b2, fc1_dtype=fc1_dtype)
    jax.block_until_ready(probs)

    # Pure-JAX reference of the same forward pass (using the same fc1 input rounding).
    x_eff = x.astype(fc1_dtype).astype(jnp.float32)
    w1_eff = w1.astype(fc1_dtype).astype(jnp.float32)
    ref = jax.nn.softmax(jnp.maximum(x_eff @ w1_eff + b1, 0.0) @ w2 + b2, axis=-1)

    tol = 1e-5 if jnp.dtype(fc1_dtype) == jnp.dtype(jnp.float32) else 1e-2

    assert probs.shape == (batch, action_size)
    assert bool(jnp.all(jnp.isfinite(probs)))
    assert jnp.allclose(jnp.sum(probs, axis=-1), 1.0, atol=1e-5)
    assert jnp.allclose(probs, ref, atol=tol, rtol=tol)

    print("KERNEL_OK")
</pallas_src>

<mosaic_0001>
module attributes {stable_mosaic.version = 11 : i64} {
  func.func @policy_kernel(%arg0: i32, %arg1: memref<24x4xf32, #tpu.memory_space<vmem>>, %arg2: memref<4x128xf32, #tpu.memory_space<vmem>>, %arg3: memref<1x128xf32, #tpu.memory_space<vmem>>, %arg4: memref<128x128xf32, #tpu.memory_space<vmem>>, %arg5: memref<1x128xf32, #tpu.memory_space<vmem>>, %arg6: memref<24x128xf32, #tpu.memory_space<vmem>>) attributes {dimension_semantics = [#tpu.dimension_semantics<parallel>], iteration_bounds = array<i64: 2>, scalar_prefetch = 0 : i64, scratch_operands = 0 : i64, tpu.core_type = #tpu.core_type<tc>, window_params = [{transform_indices = @transform_0, window_bounds = array<i64: 24, 4>}, {pipeline_mode = #tpu.pipeline_mode<synchronous>, transform_indices = @transform_1, window_bounds = array<i64: 4, 128>}, {pipeline_mode = #tpu.pipeline_mode<synchronous>, transform_indices = @transform_2, window_bounds = array<i64: 1, 128>}, {pipeline_mode = #tpu.pipeline_mode<synchronous>, transform_indices = @transform_3, window_bounds = array<i64: 128, 128>}, {pipeline_mode = #tpu.pipeline_mode<synchronous>, transform_indices = @transform_4, window_bounds = array<i64: 1, 128>}, {transform_indices = @transform_5, window_bounds = array<i64: 24, 128>}]} {
    %c0 = arith.constant 0 : index
    %c0_0 = arith.constant 0 : index
    %0 = vector.load %arg1[%c0, %c0_0] : memref<24x4xf32, #tpu.memory_space<vmem>>, vector<24x4xf32>
    %c0_1 = arith.constant 0 : index
    %c0_2 = arith.constant 0 : index
    %1 = vector.load %arg2[%c0_1, %c0_2] : memref<4x128xf32, #tpu.memory_space<vmem>>, vector<4x128xf32>
    %c0_3 = arith.constant 0 : index
    %c0_4 = arith.constant 0 : index
    %2 = vector.load %arg3[%c0_3, %c0_4] : memref<1x128xf32, #tpu.memory_space<vmem>>, vector<1x128xf32>
    %3 = vector.shape_cast %2 : vector<1x128xf32> to vector<1x128xf32>
    %4 = vector.broadcast %3 : vector<1x128xf32> to vector<24x128xf32>
    %5 = vector.extract_strided_slice %0 {offsets = [0, 0], sizes = [24, 1], strides = [1, 1]} : vector<24x4xf32> to vector<24x1xf32>
    %6 = vector.extract_strided_slice %1 {offsets = [0, 0], sizes = [1, 128], strides = [1, 1]} : vector<4x128xf32> to vector<1x128xf32>
    %7 = vector.broadcast %5 : vector<24x1xf32> to vector<24x128xf32>
    %8 = vector.broadcast %6 : vector<1x128xf32> to vector<24x128xf32>
    %9 = arith.mulf %7, %8 : vector<24x128xf32>
    %10 = arith.addf %4, %9 : vector<24x128xf32>
    %11 = vector.extract_strided_slice %0 {offsets = [0, 1], sizes = [24, 1], strides = [1, 1]} : vector<24x4xf32> to vector<24x1xf32>
    %12 = vector.extract_strided_slice %1 {offsets = [1, 0], sizes = [1, 128], strides = [1, 1]} : vector<4x128xf32> to vector<1x128xf32>
    %13 = vector.broadcast %11 : vector<24x1xf32> to vector<24x128xf32>
    %14 = vector.broadcast %12 : vector<1x128xf32> to vector<24x128xf32>
    %15 = arith.mulf %13, %14 : vector<24x128xf32>
    %16 = arith.addf %10, %15 : vector<24x128xf32>
    %17 = vector.extract_strided_slice %0 {offsets = [0, 2], sizes = [24, 1], strides = [1, 1]} : vector<24x4xf32> to vector<24x1xf32>
    %18 = vector.extract_strided_slice %1 {offsets = [2, 0], sizes = [1, 128], strides = [1, 1]} : vector<4x128xf32> to vector<1x128xf32>
    %19 = vector.broadcast %17 : vector<24x1xf32> to vector<24x128xf32>
    %20 = vector.broadcast %18 : vector<1x128xf32> to vector<24x128xf32>
    %21 = arith.mulf %19, %20 : vector<24x128xf32>
    %22 = arith.addf %16, %21 : vector<24x128xf32>
    %23 = vector.extract_strided_slice %0 {offsets = [0, 3], sizes = [24, 1], strides = [1, 1]} : vector<24x4xf32> to vector<24x1xf32>
    %24 = vector.extract_strided_slice %1 {offsets = [3, 0], sizes = [1, 128], strides = [1, 1]} : vector<4x128xf32> to vector<1x128xf32>
    %25 = vector.broadcast %23 : vector<24x1xf32> to vector<24x128xf32>
    %26 = vector.broadcast %24 : vector<1x128xf32> to vector<24x128xf32>
    %27 = arith.mulf %25, %26 : vector<24x128xf32>
    %28 = arith.addf %22, %27 : vector<24x128xf32>
    %cst = arith.constant 0.000000e+00 : f32
    %29 = vector.broadcast %cst : f32 to vector<24x128xf32>
    %30 = arith.maximumf %28, %29 : vector<24x128xf32>
    %c0_5 = arith.constant 0 : index
    %c0_6 = arith.constant 0 : index
    %31 = vector.load %arg4[%c0_5, %c0_6] : memref<128x128xf32, #tpu.memory_space<vmem>>, vector<128x128xf32>
    %cst_7 = arith.constant dense<0.000000e+00> : vector<24x128xf32>
    %32 = tpu.matmul %30, %31, %cst_7 {dimension_numbers = #tpu.dot_dimension_numbers<[1], [0], [0], [1], [0, 0, 1, 1], [], []>} : vector<24x128xf32>, vector<128x128xf32>, vector<24x128xf32> -> vector<24x128xf32>
    %c0_8 = arith.constant 0 : index
    %c0_9 = arith.constant 0 : index
    %33 = vector.load %arg5[%c0_8, %c0_9] : memref<1x128xf32, #tpu.memory_space<vmem>>, vector<1x128xf32>
    %34 = vector.broadcast %33 : vector<1x128xf32> to vector<24x128xf32>
    %35 = arith.addf %32, %34 : vector<24x128xf32>
    %cst_10 = arith.constant dense<0xFF800000> : vector<24xf32>
    %36 = vector.multi_reduction <maximumf>, %35, %cst_10 [1] : vector<24x128xf32> to vector<24xf32>
    %37 = vector.shape_cast %36 : vector<24xf32> to vector<24x1xf32>
    %38 = vector.broadcast %37 : vector<24x1xf32> to vector<24x128xf32>
    %39 = arith.subf %35, %38 : vector<24x128xf32>
    %40 = math.exp %39 : vector<24x128xf32>
    %cst_11 = arith.constant dense<0.000000e+00> : vector<24xf32>
    %41 = vector.multi_reduction <add>, %40, %cst_11 [1] : vector<24x128xf32> to vector<24xf32>
    %42 = vector.shape_cast %41 : vector<24xf32> to vector<24x1xf32>
    %43 = tpu.reciprocal %42 : vector<24x1xf32> -> vector<24x1xf32>
    %44 = vector.broadcast %43 : vector<24x1xf32> to vector<24x128xf32>
    %45 = arith.mulf %40, %44 : vector<24x128xf32>
    %c0_12 = arith.constant 0 : index
    %c0_13 = arith.constant 0 : index
    %46 = vector.load %arg6[%c0_12, %c0_13] : memref<24x128xf32, #tpu.memory_space<vmem>>, vector<24x128xf32>
    tpu.vector_store %arg6[%c0_12, %c0_13], %45 {strides = array<i32>} : memref<24x128xf32, #tpu.memory_space<vmem>>, vector<24x128xf32>,
    return
  }
  func.func @transform_0(%arg0: i32) -> (i32, i32) {
    %c0_i32 = arith.constant 0 : i32
    %c0_i32_0 = arith.constant 0 : i32
    return %arg0, %c0_i32 : i32, i32
  }
  func.func @transform_1(%arg0: i32) -> (i32, i32) {
    %c0_i32 = arith.constant 0 : i32
    %c0_i32_0 = arith.constant 0 : i32
    %c0_i32_1 = arith.constant 0 : i32
    return %c0_i32, %c0_i32_0 : i32, i32
  }
  func.func @transform_2(%arg0: i32) -> (i32, i32) {
    %c0_i32 = arith.constant 0 : i32
    %c0_i32_0 = arith.constant 0 : i32
    %c0_i32_1 = arith.constant 0 : i32
    return %c0_i32, %c0_i32_0 : i32, i32
  }
  func.func @transform_3(%arg0: i32) -> (i32, i32) {
    %c0_i32 = arith.constant 0 : i32
    %c0_i32_0 = arith.constant 0 : i32
    %c0_i32_1 = arith.constant 0 : i32
    return %c0_i32, %c0_i32_0 : i32, i32
  }
  func.func @transform_4(%arg0: i32) -> (i32, i32) {
    %c0_i32 = arith.constant 0 : i32
    %c0_i32_0 = arith.constant 0 : i32
    %c0_i32_1 = arith.constant 0 : i32
    return %c0_i32, %c0_i32_0 : i32, i32
  }
  func.func @transform_5(%arg0: i32) -> (i32, i32) {
    %c0_i32 = arith.constant 0 : i32
    %c0_i32_0 = arith.constant 0 : i32
    return %arg0, %c0_i32 : i32, i32
  }
}

module attributes {stable_mosaic.version = 11 : i64} {
  func.func @policy_kernel(%arg0: i32, %arg1: memref<24x4xf32, #tpu.memory_space<vmem>>, %arg2: memref<4x128xf32, #tpu.memory_space<vmem>>, %arg3: memref<1x128xf32, #tpu.memory_space<vmem>>, %arg4: memref<128x128xf32, #tpu.memory_space<vmem>>, %arg5: memref<1x128xf32, #tpu.memory_space<vmem>>, %arg6: memref<24x128xf32, #tpu.memory_space<vmem>>) attributes {dimension_semantics = [#tpu.dimension_semantics<parallel>], iteration_bounds = array<i64: 2>, scalar_prefetch = 0 : i64, scratch_operands = 0 : i64, tpu.core_type = #tpu.core_type<tc>, window_params = [{transform_indices = @transform_0, window_bounds = array<i64: 24, 4>}, {pipeline_mode = #tpu.pipeline_mode<synchronous>, transform_indices = @transform_1, window_bounds = array<i64: 4, 128>}, {pipeline_mode = #tpu.pipeline_mode<synchronous>, transform_indices = @transform_2, window_bounds = array<i64: 1, 128>}, {pipeline_mode = #tpu.pipeline_mode<synchronous>, transform_indices = @transform_3, window_bounds = array<i64: 128, 128>}, {pipeline_mode = #tpu.pipeline_mode<synchronous>, transform_indices = @transform_4, window_bounds = array<i64: 1, 128>}, {transform_indices = @transform_5, window_bounds = array<i64: 24, 128>}]} {
    %c0 = arith.constant 0 : index
    %c0_0 = arith.constant 0 : index
    %0 = vector.load %arg1[%c0, %c0_0] : memref<24x4xf32, #tpu.memory_space<vmem>>, vector<24x4xf32>
    %c0_1 = arith.constant 0 : index
    %c0_2 = arith.constant 0 : index
    %1 = vector.load %arg2[%c0_1, %c0_2] : memref<4x128xf32, #tpu.memory_space<vmem>>, vector<4x128xf32>
    %c0_3 = arith.constant 0 : index
    %c0_4 = arith.constant 0 : index
    %2 = vector.load %arg3[%c0_3, %c0_4] : memref<1x128xf32, #tpu.memory_space<vmem>>, vector<1x128xf32>
    %3 = vector.shape_cast %2 : vector<1x128xf32> to vector<1x128xf32>
    %4 = vector.broadcast %3 : vector<1x128xf32> to vector<24x128xf32>
    %5 = vector.extract_strided_slice %0 {offsets = [0, 0], sizes = [24, 1], strides = [1, 1]} : vector<24x4xf32> to vector<24x1xf32>
    %6 = vector.extract_strided_slice %1 {offsets = [0, 0], sizes = [1, 128], strides = [1, 1]} : vector<4x128xf32> to vector<1x128xf32>
    %7 = vector.broadcast %5 : vector<24x1xf32> to vector<24x128xf32>
    %8 = vector.broadcast %6 : vector<1x128xf32> to vector<24x128xf32>
    %9 = arith.mulf %7, %8 : vector<24x128xf32>
    %10 = arith.addf %4, %9 : vector<24x128xf32>
    %11 = vector.extract_strided_slice %0 {offsets = [0, 1], sizes = [24, 1], strides = [1, 1]} : vector<24x4xf32> to vector<24x1xf32>
    %12 = vector.extract_strided_slice %1 {offsets = [1, 0], sizes = [1, 128], strides = [1, 1]} : vector<4x128xf32> to vector<1x128xf32>
    %13 = vector.broadcast %11 : vector<24x1xf32> to vector<24x128xf32>
    %14 = vector.broadcast %12 : vector<1x128xf32> to vector<24x128xf32>
    %15 = arith.mulf %13, %14 : vector<24x128xf32>
    %16 = arith.addf %10, %15 : vector<24x128xf32>
    %17 = vector.extract_strided_slice %0 {offsets = [0, 2], sizes = [24, 1], strides = [1, 1]} : vector<24x4xf32> to vector<24x1xf32>
    %18 = vector.extract_strided_slice %1 {offsets = [2, 0], sizes = [1, 128], strides = [1, 1]} : vector<4x128xf32> to vector<1x128xf32>
    %19 = vector.broadcast %17 : vector<24x1xf32> to vector<24x128xf32>
    %20 = vector.broadcast %18 : vector<1x128xf32> to vector<24x128xf32>
    %21 = arith.mulf %19, %20 : vector<24x128xf32>
    %22 = arith.addf %16, %21 : vector<24x128xf32>
    %23 = vector.extract_strided_slice %0 {offsets = [0, 3], sizes = [24, 1], strides = [1, 1]} : vector<24x4xf32> to vector<24x1xf32>
    %24 = vector.extract_strided_slice %1 {offsets = [3, 0], sizes = [1, 128], strides = [1, 1]} : vector<4x128xf32> to vector<1x128xf32>
    %25 = vector.broadcast %23 : vector<24x1xf32> to vector<24x128xf32>
    %26 = vector.broadcast %24 : vector<1x128xf32> to vector<24x128xf32>
    %27 = arith.mulf %25, %26 : vector<24x128xf32>
    %28 = arith.addf %22, %27 : vector<24x128xf32>
    %cst = arith.constant 0.000000e+00 : f32
    %29 = vector.broadcast %cst : f32 to vector<24x128xf32>
    %30 = arith.maximumf %28, %29 : vector<24x128xf32>
    %c0_5 = arith.constant 0 : index
    %c0_6 = arith.constant 0 : index
    %31 = vector.load %arg4[%c0_5, %c0_6] : memref<128x128xf32, #tpu.memory_space<vmem>>, vector<128x128xf32>
    %cst_7 = arith.constant dense<0.000000e+00> : vector<24x128xf32>
    %32 = tpu.matmul %30, %31, %cst_7 {dimension_numbers = #tpu.dot_dimension_numbers<[1], [0], [0], [1], [0, 0, 1, 1], [], []>} : vector<24x128xf32>, vector<128x128xf32>, vector<24x128xf32> -> vector<24x128xf32>
    %c0_8 = arith.constant 0 : index
    %c0_9 = arith.constant 0 : index
    %33 = vector.load %arg5[%c0_8, %c0_9] : memref<1x128xf32, #tpu.memory_space<vmem>>, vector<1x128xf32>
    %34 = vector.broadcast %33 : vector<1x128xf32> to vector<24x128xf32>
    %35 = arith.addf %32, %34 : vector<24x128xf32>
    %cst_10 = arith.constant dense<0xFF800000> : vector<24xf32>
    %36 = vector.multi_reduction <maximumf>, %35, %cst_10 [1] : vector<24x128xf32> to vector<24xf32>
    %37 = vector.shape_cast %36 : vector<24xf32> to vector<24x1xf32>
    %38 = vector.broadcast %37 : vector<24x1xf32> to vector<24x128xf32>
    %39 = arith.subf %35, %38 : vector<24x128xf32>
    %40 = math.exp %39 : vector<24x128xf32>
    %cst_11 = arith.constant dense<0.000000e+00> : vector<24xf32>
    %41 = vector.multi_reduction <add>, %40, %cst_11 [1] : vector<24x128xf32> to vector<24xf32>
    %42 = vector.shape_cast %41 : vector<24xf32> to vector<24x1xf32>
    %43 = tpu.reciprocal %42 : vector<24x1xf32> -> vector<24x1xf32>
    %44 = vector.broadcast %43 : vector<24x1xf32> to vector<24x128xf32>
    %45 = arith.mulf %40, %44 : vector<24x128xf32>
    %c0_12 = arith.constant 0 : index
    %c0_13 = arith.constant 0 : index
    %46 = vector.load %arg6[%c0_12, %c0_13] : memref<24x128xf32, #tpu.memory_space<vmem>>, vector<24x128xf32>
    tpu.vector_store %arg6[%c0_12, %c0_13], %45 {strides = array<i32>} : memref<24x128xf32, #tpu.memory_space<vmem>>, vector<24x128xf32>,
    return
  }
  func.func @transform_0(%arg0: i32) -> (i32, i32) {
    %c0_i32 = arith.constant 0 : i32
    %c0_i32_0 = arith.constant 0 : i32
    return %arg0, %c0_i32 : i32, i32
  }
  func.func @transform_1(%arg0: i32) -> (i32, i32) {
    %c0_i32 = arith.constant 0 : i32
    %c0_i32_0 = arith.constant 0 : i32
    %c0_i32_1 = arith.constant 0 : i32
    return %c0_i32, %c0_i32_0 : i32, i32
  }
  func.func @transform_2(%arg0: i32) -> (i32, i32) {
    %c0_i32 = arith.constant 0 : i32
    %c0_i32_0 = arith.constant 0 : i32
    %c0_i32_1 = arith.constant 0 : i32
    return %c0_i32, %c0_i32_0 : i32, i32
  }
  func.func @transform_3(%arg0: i32) -> (i32, i32) {
    %c0_i32 = arith.constant 0 : i32
    %c0_i32_0 = arith.constant 0 : i32
    %c0_i32_1 = arith.constant 0 : i32
    return %c0_i32, %c0_i32_0 : i32, i32
  }
  func.func @transform_4(%arg0: i32) -> (i32, i32) {
    %c0_i32 = arith.constant 0 : i32
    %c0_i32_0 = arith.constant 0 : i32
    %c0_i32_1 = arith.constant 0 : i32
    return %c0_i32, %c0_i32_0 : i32, i32
  }
  func.func @transform_5(%arg0: i32) -> (i32, i32) {
    %c0_i32 = arith.constant 0 : i32
    %c0_i32_0 = arith.constant 0 : i32
    return %arg0, %c0_i32 : i32, i32
  }
}

</mosaic_0001>

<llo_original>
// kernel: _policy_forward_impl.1
$region0: #{_policy_forward_impl.1}
  #allocation0 [shape = 'u32[]', space=smem, size = 0x4, offset = 0x4, fixed_abs, tag = 'smem constant byte address 0x4 - core index']
  #allocation1 [shape = 'u32[72,128]{1,0:T(1,128)}', space=vmem, size = 0x9000, scoped, tag = 'internal scratch']
  %s0 = inlined_call_operand.vmem [shape: f32[48,4], index: 0, kind: input, shape index: {}]
  %s1 = inlined_call_operand.vmem [shape: f32[4,128], index: 1, kind: input, shape index: {}]
  %s2 = inlined_call_operand.vmem [shape: f32[1,128], index: 2, kind: input, shape index: {}]
  %s3 = inlined_call_operand.vmem [shape: f32[128,128], index: 3, kind: input, shape index: {}]
  %s4 = inlined_call_operand.vmem [shape: f32[1,128], index: 4, kind: input, shape index: {}]
  %s5 = inlined_call_operand.vmem [shape: f32[48,128], index: 5, kind: output, shape index: {}]
  %s6 = sld [smem:[#allocation0]]
  $region53: #{_policy_forward_impl.1} parent=0
    _
  %s8 = ssub.s32 1, %s6
  %s9 = scalar_select 0, %s8, %s6
  loop: start=0, step=1, limit=4
  $region2: #{_policy_forward_impl.1} parent=0 // loop_pre_header
    _
  $region3: #{_policy_forward_impl.1} parent=0 // loop_header
    %s11 = sphi 0, %s15
    %p12 = scmp.ge.s32.totalorder %s11, 4
    %s21 = sphi 0, %s23
    %s24 = sphi 0, %s21
    %s25 = sphi 0, %s24
    %s41 = sphi 0, %s25
    %s45 = sphi 0, %s45
    %s47 = sphi 0, %s45
    %s48 = sphi 0, %s47
    %s62 = sphi 0, %s48
    %s66 = sphi 0, %s66
    %s68 = sphi 0, %s66
    %s69 = sphi 0, %s68
    %s83 = sphi 0, %s69
    %s87 = sphi 0, %s87
    %s89 = sphi 0, %s87
    %s90 = sphi 0, %s89
    %s104 = sphi 0, %s90
    %s108 = sphi 0, %s108
    %s110 = sphi 0, %s108
    %s111 = sphi 0, %s110
    %s125 = sphi 0, %s111
    %s131 = sphi 0, %s133
    %s134 = sphi 0, %s131
    %s135 = sphi 0, %s134
    %s151 = sphi 0, %s135
  $region4: #{_policy_forward_impl.1} parent=0 // loop_header_branch
    %14 = sbr.rel (%p12) target = $region8
  $region5: #{_policy_forward_impl.1} parent=0 // loop_body
    %s16 = ssub.s32 %s11, 1
    %s17 = ssub.s32 %s11, 2
    %s18 = sadd.s32 %s11, 1
    %s19 = ssub.s32 %s11, %s18
    %p20 = scmp.eq.s32.totalorder %s19, 0
    %s22 = sadd.s32 %s21, 1
    %s23 = scalar_select %p20, %s21, %s22
    %p26 = pneg %p20
    %p27 = scmp.eq.s32.totalorder %s11, 1
    %p28 = por %p26, %p27
    %p29 = scmp.ne.s32.totalorder %s21, %s24
    %p30 = scmp.eq.s32.totalorder %s11, 0
    %p31 = por %p29, %p30
    %p32 = scmp.ne.s32.totalorder %s21, %s24
    %p33 = scmp.eq.s32.totalorder %s16, 1
    %p34 = por %p32, %p33
    %p35 = scmp.ne.s32.totalorder %s24, %s25
    %p36 = scmp.eq.s32.totalorder %s16, 0
    %p37 = por %p35, %p36
    %p38 = scmp.ne.s32.totalorder %s24, %s25
    %p39 = scmp.eq.s32.totalorder %s17, 1
    %p40 = por %p38, %p39
    %p42 = scmp.ne.s32.totalorder %s25, %s41
    %p43 = scmp.eq.s32.totalorder %s17, 0
    %p44 = por %p42, %p43
    %s46 = sadd.s32 %s45, 1
    %p49 = scmp.eq.s32.totalorder %s11, 1
    %p50 = scmp.ne.s32.totalorder %s45, %s47
    %p51 = scmp.eq.s32.totalorder %s11, 0
    %p52 = por %p50, %p51
    %p53 = scmp.ne.s32.totalorder %s45, %s47
    %p54 = scmp.eq.s32.totalorder %s16, 1
    %p55 = por %p53, %p54
    %p56 = scmp.ne.s32.totalorder %s47, %s48
    %p57 = scmp.eq.s32.totalorder %s16, 0
    %p58 = por %p56, %p57
    %p59 = scmp.ne.s32.totalorder %s47, %s48
    %p60 = scmp.eq.s32.totalorder %s17, 1
    %p61 = por %p59, %p60
    %p63 = scmp.ne.s32.totalorder %s48, %s62
    %p64 = scmp.eq.s32.totalorder %s17, 0
    %p65 = por %p63, %p64
    %s67 = sadd.s32 %s66, 1
    %p70 = scmp.eq.s32.totalorder %s11, 1
    %p71 = scmp.ne.s32.totalorder %s66, %s68
    %p72 = scmp.eq.s32.totalorder %s11, 0
    %p73 = por %p71, %p72
    %p74 = scmp.ne.s32.totalorder %s66, %s68
    %p75 = scmp.eq.s32.totalorder %s16, 1
    %p76 = por %p74, %p75
    %p77 = scmp.ne.s32.totalorder %s68, %s69
    %p78 = scmp.eq.s32.totalorder %s16, 0
    %p79 = por %p77, %p78
    %p80 = scmp.ne.s32.totalorder %s68, %s69
    %p81 = scmp.eq.s32.totalorder %s17, 1
    %p82 = por %p80, %p81
    %p84 = scmp.ne.s32.totalorder %s69, %s83
    %p85 = scmp.eq.s32.totalorder %s17, 0
    %p86 = por %p84, %p85
    %s88 = sadd.s32 %s87, 1
    %p91 = scmp.eq.s32.totalorder %s11, 1
    %p92 = scmp.ne.s32.totalorder %s87, %s89
    %p93 = scmp.eq.s32.totalorder %s11, 0
    %p94 = por %p92, %p93
    %p95 = scmp.ne.s32.totalorder %s87, %s89
    %p96 = scmp.eq.s32.totalorder %s16, 1
    %p97 = por %p95, %p96
    %p98 = scmp.ne.s32.totalorder %s89, %s90
    %p99 = scmp.eq.s32.totalorder %s16, 0
    %p100 = por %p98, %p99
    %p101 = scmp.ne.s32.totalorder %s89, %s90
    %p102 = scmp.eq.s32.totalorder %s17, 1
    %p103 = por %p101, %p102
    %p105 = scmp.ne.s32.totalorder %s90, %s104
    %p106 = scmp.eq.s32.totalorder %s17, 0
    %p107 = por %p105, %p106
    %s109 = sadd.s32 %s108, 1
    %p112 = scmp.eq.s32.totalorder %s11, 1
    %p113 = scmp.ne.s32.totalorder %s108, %s110
    %p114 = scmp.eq.s32.totalorder %s11, 0
    %p115 = por %p113, %p114
    %p116 = scmp.ne.s32.totalorder %s108, %s110
    %p117 = scmp.eq.s32.totalorder %s16, 1
    %p118 = por %p116, %p117
    %p119 = scmp.ne.s32.totalorder %s110, %s111
    %p120 = scmp.eq.s32.totalorder %s16, 0
    %p121 = por %p119, %p120
    %p122 = scmp.ne.s32.totalorder %s110, %s111
    %p123 = scmp.eq.s32.totalorder %s17, 1
    %p124 = por %p122, %p123
    %p126 = scmp.ne.s32.totalorder %s111, %s125
    %p127 = scmp.eq.s32.totalorder %s17, 0
    %p128 = por %p126, %p127
    %s129 = ssub.s32 %s11, %s18
    %p130 = scmp.eq.s32.totalorder %s129, 0
    %s132 = sadd.s32 %s131, 1
    %s133 = scalar_select %p130, %s131, %s132
    %p136 = pneg %p130
    %p137 = scmp.eq.s32.totalorder %s11, 1
    %p138 = por %p136, %p137
    %p139 = scmp.ne.s32.totalorder %s131, %s134
    %p140 = scmp.eq.s32.totalorder %s11, 0
    %p141 = por %p139, %p140
    %p142 = scmp.ne.s32.totalorder %s131, %s134
    %p143 = scmp.eq.s32.totalorder %s16, 1
    %p144 = por %p142, %p143
    %p145 = scmp.ne.s32.totalorder %s134, %s135
    %p146 = scmp.eq.s32.totalorder %s16, 0
    %p147 = por %p145, %p146
    %p148 = scmp.ne.s32.totalorder %s134, %s135
    %p149 = scmp.eq.s32.totalorder %s17, 1
    %p150 = por %p148, %p149
    %p152 = scmp.ne.s32.totalorder %s135, %s151
    %p153 = scmp.eq.s32.totalorder %s17, 0
    %p154 = por %p152, %p153
    %p155 = scmp.le.s32.totalorder 1, %s11
    %p156 = scmp.lt.s32.totalorder %s11, 3
    %p157 = pnand %p155, %p156
    %p158 = pneg %p157
    // Predicated region
    $region9: #{_policy_forward_impl.1} parent=5 // pred_check
      _
    $region10: #{_policy_forward_impl.1} parent=5 // pred_check_branch
      %160 = sbr.rel (%p157) target = $region12
    $region11: #{_policy_forward_impl.1} parent=5 // pred_region
      %s161 = ssub.s32 %s11, 1
      // Predicated region
      $region13: #{_policy_forward_impl.1} parent=11 // pred_check
        %p162 = pneg %p58
      $region14: #{_policy_forward_impl.1} parent=11 // pred_check_branch
        %164 = sbr.rel (%p162) target = $region16
      $region15: #{_policy_forward_impl.1} parent=11 // pred_region
        _
      $region16: #{_policy_forward_impl.1} parent=11 // pred_fallthru
        _
      // Predicated region
      $region17: #{_policy_forward_impl.1} parent=11 // pred_check
        %p165 = pneg %p79
      $region18: #{_policy_forward_impl.1} parent=11 // pred_check_branch
        %167 = sbr.rel (%p165) target = $region20
      $region19: #{_policy_forward_impl.1} parent=11 // pred_region
        _
      $region20: #{_policy_forward_impl.1} parent=11 // pred_fallthru
        _
      // Predicated region
      $region21: #{_policy_forward_impl.1} parent=11 // pred_check
        %p168 = pneg %p100
      $region22: #{_policy_forward_impl.1} parent=11 // pred_check_branch
        %170 = sbr.rel (%p168) target = $region24
      $region23: #{_policy_forward_impl.1} parent=11 // pred_region
        _
      $region24: #{_policy_forward_impl.1} parent=11 // pred_fallthru
        _
      // Predicated region
      $region25: #{_policy_forward_impl.1} parent=11 // pred_check
        %p171 = pneg %p121
      $region26: #{_policy_forward_impl.1} parent=11 // pred_check_branch
        %173 = sbr.rel (%p171) target = $region28
      $region27: #{_policy_forward_impl.1} parent=11 // pred_region
        _
      $region28: #{_policy_forward_impl.1} parent=11 // pred_fallthru
        _
    $region12: #{_policy_forward_impl.1} parent=5 // pred_fallthru
      _
    %p174 = scmp.lt.s32.totalorder %s11, 2
    // Predicated region
    $region29: #{_policy_forward_impl.1} parent=5 // pred_check
      %p175 = pneg %p174
    $region30: #{_policy_forward_impl.1} parent=5 // pred_check_branch
      %177 = sbr.rel (%p175) target = $region32
    $region31: #{_policy_forward_impl.1} parent=5 // pred_region
      // Predicated region
      $region33: #{_policy_forward_impl.1} parent=31 // pred_check
        %p178 = pneg %p31
      $region34: #{_policy_forward_impl.1} parent=31 // pred_check_branch
        %180 = sbr.rel (%p178) target = $region36
      $region35: #{_policy_forward_impl.1} parent=31 // pred_region
        %s181 = smul.u32 3, %s11
        %p182 = scmp.lt.s32.totalorder %s181, 5
        %s183 = scalar_select %p182, %s181, 5
        %s184 = smul.addr %s183, 8
        %s185 = scalar_lea.vmem %s0, %s184
        %s186 = smul.u32 3, %s11
      $region36: #{_policy_forward_impl.1} parent=31 // pred_fallthru
        _
    $region32: #{_policy_forward_impl.1} parent=5 // pred_fallthru
      _
    %p187 = scmp.le.s32.totalorder 1, %s11
    %p188 = scmp.lt.s32.totalorder %s11, 3
    %p189 = pnand %p187, %p188
    %p190 = pneg %p189
    // Predicated region
    $region37: #{_policy_forward_impl.1} parent=5 // pred_check
      _
    $region38: #{_policy_forward_impl.1} parent=5 // pred_check_branch
      %192 = sbr.rel (%p189) target = $region40
    $region39: #{_policy_forward_impl.1} parent=5 // pred_region
      %s193 = ssub.s32 %s11, 1
      %s194 = smul.u32 3, %s16
      %p195 = scmp.lt.s32.totalorder %s194, 5
      %s196 = scalar_select %p195, %s194, 5
      %s197 = smul.addr %s196, 8
      %s198 = scalar_lea.vmem %s0, %s197
      %p199 = pneg %p37
      %p200 = pneg %p34
      %p201 = pneg %p58
      %p202 = pneg %p55
      %p203 = pneg %p79
      %p204 = pneg %p76
      %p205 = pneg %p100
      %p206 = pneg %p97
      %p207 = pneg %p121
      %p208 = pneg %p118
      %p209 = pneg %p147
      %p210 = pneg %p144
      %s211 = smul.u32 3, %s16
      %p212 = scmp.lt.s32.totalorder %s211, 5
      %s213 = scalar_select %p212, %s211, 5
      %s214 = smul.addr %s213, 8
      %s215 = scalar_lea.vmem %s5, %s214
      %s216 = smul.u32 3, %s16
      %p217 = scmp.lt.s32.totalorder %s216, 5
      %s218 = scalar_select %p217, %s216, 5
      %s219 = smul.addr %s218, 8
      %s220 = scalar_lea.vmem %s0, %s219
      %s221 = smul.u32 3, %s16
      %s222 = smul.u32 3, %s16
      %p223 = scmp.lt.s32.totalorder %s222, 5
      %s224 = scalar_select %p223, %s222, 5
      %s225 = smul.addr %s224, 8
      %s226 = scalar_lea.vmem %s5, %s225
      %s227 = smul.u32 3, %s16
      %v228 = vld [vmem:[%s220] sm:$0xff]
      %v229 = vld [vmem:[%s220 + $0x8] sm:$0xff]
      %v230 = vld [vmem:[%s220 + $0x10] sm:$0xff]
      %v231 = vld [vmem:[%s1] sm:$0xf]
      %v232 = vld [vmem:[%s2] sm:$0x1]
      %v234 = vperm.slane %v232, 0
      %237 = vset.pattern.permute.xlu0 0
      %238 = vperm.xlu0 %237, %v228
      %v239 = vpop.permute.xlu0 %238
      %242 = vset.pattern.permute.xlu0 0
      %243 = vperm.xlu0 %242, %v229
      %v244 = vpop.permute.xlu0 %243
      %247 = vset.pattern.permute.xlu0 0
      %248 = vperm.xlu0 %247, %v230
      %v249 = vpop.permute.xlu0 %248
      %v251 = vperm.slane %v231, 0
      %v252 = vmul.f32 %v239, %v251
      %v253 = vmul.f32 %v244, %v251
      %v254 = vmul.f32 %v249, %v251
      %v255 = vadd.f32 %v234, %v252
      %v256 = vadd.f32 %v234, %v253
      %v257 = vadd.f32 %v234, %v254
      %258 = vset.pattern.permute.xlu0 1
      %259 = vperm.xlu0 %258, %v228
      %v260 = vpop.permute.xlu0 %259
      %262 = vset.pattern.permute.xlu0 1
      %263 = vperm.xlu0 %262, %v229
      %v264 = vpop.permute.xlu0 %263
      %266 = vset.pattern.permute.xlu0 1
      %267 = vperm.xlu0 %266, %v230
      %v268 = vpop.permute.xlu0 %267
      %v270 = vperm.slane %v231, 1
      %v271 = vmul.f32 %v260, %v270
      %v272 = vmul.f32 %v264, %v270
      %v273 = vmul.f32 %v268, %v270
      %v274 = vadd.f32 %v255, %v271
      %v275 = vadd.f32 %v256, %v272
      %v276 = vadd.f32 %v257, %v273
      %277 = vset.pattern.permute.xlu0 2
      %278 = vperm.xlu0 %277, %v228
      %v279 = vpop.permute.xlu0 %278
      %281 = vset.pattern.permute.xlu0 2
      %282 = vperm.xlu0 %281, %v229
      %v283 = vpop.permute.xlu0 %282
      %285 = vset.pattern.permute.xlu0 2
      %286 = vperm.xlu0 %285, %v230
      %v287 = vpop.permute.xlu0 %286
      %v289 = vperm.slane %v231, 2
      %v290 = vmul.f32 %v279, %v289
      %v291 = vmul.f32 %v283, %v289
      %v292 = vmul.f32 %v287, %v289
      %v293 = vadd.f32 %v274, %v290
      %v294 = vadd.f32 %v275, %v291
      %v295 = vadd.f32 %v276, %v292
      %296 = vset.pattern.permute.xlu0 3
      %297 = vperm.xlu0 %296, %v228
      %v298 = vpop.permute.xlu0 %297
      %300 = vset.pattern.permute.xlu0 3
      %301 = vperm.xlu0 %300, %v229
      %v302 = vpop.permute.xlu0 %301
      %304 = vset.pattern.permute.xlu0 3
      %305 = vperm.xlu0 %304, %v230
      %v306 = vpop.permute.xlu0 %305
      %v308 = vperm.slane %v231, 3
      %v309 = vmul.f32 %v298, %v308
      %v310 = vmul.f32 %v302, %v308
      %v311 = vmul.f32 %v306, %v308
      %v312 = vadd.f32 %v293, %v309
      %v313 = vadd.f32 %v294, %v310
      %v314 = vadd.f32 %v295, %v311
      %v315 = vmax.f32 %v312, 0.0
      %v316 = vmax.f32 %v313, 0.0
      %v317 = vmax.f32 %v314, 0.0
      %v318 = vld [vmem:[%s3] sm:$0xff]
      %v319 = vld [vmem:[%s3 + $0x8] sm:$0xff]
      %v320 = vld [vmem:[%s3 + $0x10] sm:$0xff]
      %v321 = vld [vmem:[%s3 + $0x18] sm:$0xff]
      %v322 = vld [vmem:[%s3 + $0x20] sm:$0xff]
      %v323 = vld [vmem:[%s3 + $0x28] sm:$0xff]
      %v324 = vld [vmem:[%s3 + $0x30] sm:$0xff]
      %v325 = vld [vmem:[%s3 + $0x38] sm:$0xff]
      %v326 = vld [vmem:[%s3 + $0x40] sm:$0xff]
      %v327 = vld [vmem:[%s3 + $0x48] sm:$0xff]
      %v328 = vld [vmem:[%s3 + $0x50] sm:$0xff]
      %v329 = vld [vmem:[%s3 + $0x58] sm:$0xff]
      %v330 = vld [vmem:[%s3 + $0x60] sm:$0xff]
      %v331 = vld [vmem:[%s3 + $0x68] sm:$0xff]
      %v332 = vld [vmem:[%s3 + $0x70] sm:$0xff]
      %v333 = vld [vmem:[%s3 + $0x78] sm:$0xff]
      %v334 = vld [vmem:[%s4] sm:$0x1]
      %v336 = vperm.slane %v334, 0
      %338 = vmatpush.msra.mxu0 %v333
      %339 = vmatpush.msra.mxu0 %v332
      %340 = vmatpush.msra.mxu0 %v331
      %341 = vmatpush.msra.mxu0 %v330
      %342 = vmatpush.msra.mxu0 %v329
      %343 = vmatpush.msra.mxu0 %v328
      %344 = vmatpush.msra.mxu0 %v327
      %345 = vmatpush.msra.mxu0 %v326
      %346 = vmatpush.msra.mxu0 %v325
      %347 = vmatpush.msra.mxu0 %v324
      %348 = vmatpush.msra.mxu0 %v323
      %349 = vmatpush.msra.mxu0 %v322
      %350 = vmatpush.msra.mxu0 %v321
      %351 = vmatpush.msra.mxu0 %v320
      %352 = vmatpush.msra.mxu0 %v319
      %353 = vmatpush.msra.mxu0 %v318
      %354 = vmatmul.f32.gmra.mxu0 %v315
      %v355 = vpop.f32.mrf.mxu0
      %v356 = vadd.f32 %v336, %v355
      %357 = vmatmul.f32.gmra.mxu0 %v316
      %v358 = vpop.f32.mrf.mxu0
      %v359 = vadd.f32 %v336, %v358
      %360 = vmatmul.f32.gmra.mxu0 %v317
      %v361 = vpop.f32.mrf.mxu0
      %v362 = vadd.f32 %v336, %v361
      %363 = vdwg.mxu0
      %364 = vmax.xlane.f32.xlu0 %v356
      %v365 = vpop.xlane.xlu0 %364
      %366 = vmax.xlane.f32.xlu0 %v359
      %v367 = vpop.xlane.xlu0 %366
      %368 = vmax.xlane.f32.xlu0 %v362
      %v369 = vpop.xlane.xlu0 %368
      %v370 = vsub.f32 %v356, %v365
      %v371 = vsub.f32 %v359, %v367
      %v372 = vsub.f32 %v362, %v369
      %v373 = vmul.f32 %v370, 1.442695
      %v374 = vpow.pop %v373
      %v375 = vmul.f32 %v371, 1.442695
      %v376 = vpow.pop %v375
      %v377 = vmul.f32 %v372, 1.442695
      %v378 = vpow.pop %v377
      %379 = vadd.xlane.f32.xlu0 %v374
      %v380 = vpop.xlane.xlu0 %379
      %381 = vadd.xlane.f32.xlu0 %v376
      %v382 = vpop.xlane.xlu0 %381
      %383 = vadd.xlane.f32.xlu0 %v378
      %v384 = vpop.xlane.xlu0 %383
      %v385 = vrcp.pop %v380
      %v386 = vmul.f32 %v380, %v385
      %v387 = vsub.f32 1.0, %v386
      %v388 = vmul.f32 %v385, %v387
      %v389 = vadd.f32 %v385, %v388
      %vm390 = vweird.f32 %v380
      %vm391 = vweird.f32 %v385
      %vm392 = vmor %vm390, %vm391
      %v393 = vsel %vm392, %v385, %v389
      %v394 = vand.u32 2147483647, %v380
      %vm395 = vcmp.eq.f32.partialorder %v394, 8.507059e+37
      %v396 = vand.u32 %v380, 2147483648
      %v397 = vor.u32 1.1754944e-38, %v396
      %v398 = vsel %vm395, %v397, %v393
      %v399 = vrcp.pop %v382
      %v400 = vmul.f32 %v382, %v399
      %v401 = vsub.f32 1.0, %v400
      %v402 = vmul.f32 %v399, %v401
      %v403 = vadd.f32 %v399, %v402
      %vm404 = vweird.f32 %v382
      %vm405 = vweird.f32 %v399
      %vm406 = vmor %vm404, %vm405
      %v407 = vsel %vm406, %v399, %v403
      %v408 = vand.u32 2147483647, %v382
      %vm409 = vcmp.eq.f32.partialorder %v408, 8.507059e+37
      %v410 = vand.u32 %v382, 2147483648
      %v411 = vor.u32 1.1754944e-38, %v410
      %v412 = vsel %vm409, %v411, %v407
      %v413 = vrcp.pop %v384
      %v414 = vmul.f32 %v384, %v413
      %v415 = vsub.f32 1.0, %v414
      %v416 = vmul.f32 %v413, %v415
      %v417 = vadd.f32 %v413, %v416
      %vm418 = vweird.f32 %v384
      %vm419 = vweird.f32 %v413
      %vm420 = vmor %vm418, %vm419
      %v421 = vsel %vm420, %v413, %v417
      %v422 = vand.u32 2147483647, %v384
      %vm423 = vcmp.eq.f32.partialorder %v422, 8.507059e+37
      %v424 = vand.u32 %v384, 2147483648
      %v425 = vor.u32 1.1754944e-38, %v424
      %v426 = vsel %vm423, %v425, %v421
      %v427 = vmul.f32 %v374, %v398
      %v428 = vmul.f32 %v376, %v412
      %v429 = vmul.f32 %v378, %v426
      %430 = vst [vmem:[%s226] sm:$0xff] %v427
      %431 = vst [vmem:[%s226 + $0x8] sm:$0xff] %v428
      %432 = vst [vmem:[%s226 + $0x10] sm:$0xff] %v429
      %s433 = smul.u32 3, %s16
      %p434 = scmp.lt.s32.totalorder %s433, 5
      %s435 = scalar_select %p434, %s433, 5
      %s436 = smul.addr %s435, 8
      %s437 = scalar_lea.vmem %s5, %s436
      // Predicated region
      $region41: #{_policy_forward_impl.1} parent=39 // pred_check
        %p438 = pneg %p144
      $region42: #{_policy_forward_impl.1} parent=39 // pred_check_branch
        %440 = sbr.rel (%p438) target = $region44
      $region43: #{_policy_forward_impl.1} parent=39 // pred_region
        %s441 = smul.u32 3, %s16
      $region44: #{_policy_forward_impl.1} parent=39 // pred_fallthru
        _
    $region40: #{_policy_forward_impl.1} parent=5 // pred_fallthru
      _
    %p442 = scmp.le.s32.totalorder 2, %s11
    // Predicated region
    $region45: #{_policy_forward_impl.1} parent=5 // pred_check
      %p443 = pneg %p442
    $region46: #{_policy_forward_impl.1} parent=5 // pred_check_branch
      %445 = sbr.rel (%p443) target = $region48
    $region47: #{_policy_forward_impl.1} parent=5 // pred_region
      %s446 = ssub.s32 %s11, 2
      // Predicated region
      $region49: #{_policy_forward_impl.1} parent=47 // pred_check
        %p447 = pneg %p150
      $region50: #{_policy_forward_impl.1} parent=47 // pred_check_branch
        %449 = sbr.rel (%p447) target = $region52
      $region51: #{_policy_forward_impl.1} parent=47 // pred_region
        %s450 = smul.u32 3, %s17
        %p451 = scmp.lt.s32.totalorder %s450, 5
        %s452 = scalar_select %p451, %s450, 5
        %s453 = smul.addr %s452, 8
        %s454 = scalar_lea.vmem %s5, %s453
      $region52: #{_policy_forward_impl.1} parent=47 // pred_fallthru
        _
    $region48: #{_policy_forward_impl.1} parent=5 // pred_fallthru
      _
  $region6: #{_policy_forward_impl.1} parent=0 // loop_footer
    %s15 = sadd.s32 1, %s11
  $region7: #{_policy_forward_impl.1} parent=0 // loop_footer_branch
    %10 = sbr.rel target = $region3
  $region8: #{_policy_forward_impl.1} parent=0 // loop_exit
    _

// kernel: _policy_forward_impl.1
$region0: #{_policy_forward_impl.1}
  #allocation0 [shape = 'u32[]', space=smem, size = 0x4, offset = 0x4, fixed_abs, tag = 'smem constant byte address 0x4 - core index']
  #allocation1 [shape = 'u32[72,128]{1,0:T(1,128)}', space=vmem, size = 0x9000, scoped, tag = 'internal scratch']
  %s0 = inlined_call_operand.vmem [shape: f32[48,4], index: 0, kind: input, shape index: {}]
  %s1 = inlined_call_operand.vmem [shape: f32[4,128], index: 1, kind: input, shape index: {}]
  %s2 = inlined_call_operand.vmem [shape: f32[1,128], index: 2, kind: input, shape index: {}]
  %s3 = inlined_call_operand.vmem [shape: f32[128,128], index: 3, kind: input, shape index: {}]
  %s4 = inlined_call_operand.vmem [shape: f32[1,128], index: 4, kind: input, shape index: {}]
  %s5 = inlined_call_operand.vmem [shape: f32[48,128], index: 5, kind: output, shape index: {}]
  %s6 = sld [smem:[#allocation0]]
  $region53: #{_policy_forward_impl.1} parent=0
    _
  %s8 = ssub.s32 1, %s6
  %s9 = scalar_select 0, %s8, %s6
  loop: start=0, step=1, limit=4
  $region2: #{_policy_forward_impl.1} parent=0 // loop_pre_header
    _
  $region3: #{_policy_forward_impl.1} parent=0 // loop_header
    %s11 = sphi 0, %s15
    %p12 = scmp.ge.s32.totalorder %s11, 4
    %s21 = sphi 0, %s23
    %s24 = sphi 0, %s21
    %s25 = sphi 0, %s24
    %s41 = sphi 0, %s25
    %s45 = sphi 0, %s45
    %s47 = sphi 0, %s45
    %s48 = sphi 0, %s47
    %s62 = sphi 0, %s48
    %s66 = sphi 0, %s66
    %s68 = sphi 0, %s66
    %s69 = sphi 0, %s68
    %s83 = sphi 0, %s69
    %s87 = sphi 0, %s87
    %s89 = sphi 0, %s87
    %s90 = sphi 0, %s89
    %s104 = sphi 0, %s90
    %s108 = sphi 0, %s108
    %s110 = sphi 0, %s108
    %s111 = sphi 0, %s110
    %s125 = sphi 0, %s111
    %s131 = sphi 0, %s133
    %s134 = sphi 0, %s131
    %s135 = sphi 0, %s134
    %s151 = sphi 0, %s135
  $region4: #{_policy_forward_impl.1} parent=0 // loop_header_branch
    %14 = sbr.rel (%p12) target = $region8
  $region5: #{_policy_forward_impl.1} parent=0 // loop_body
    %s16 = ssub.s32 %s11, 1
    %s17 = ssub.s32 %s11, 2
    %s18 = sadd.s32 %s11, 1
    %s19 = ssub.s32 %s11, %s18
    %p20 = scmp.eq.s32.totalorder %s19, 0
    %s22 = sadd.s32 %s21, 1
    %s23 = scalar_select %p20, %s21, %s22
    %p26 = pneg %p20
    %p27 = scmp.eq.s32.totalorder %s11, 1
    %p28 = por %p26, %p27
    %p29 = scmp.ne.s32.totalorder %s21, %s24
    %p30 = scmp.eq.s32.totalorder %s11, 0
    %p31 = por %p29, %p30
    %p32 = scmp.ne.s32.totalorder %s21, %s24
    %p33 = scmp.eq.s32.totalorder %s16, 1
    %p34 = por %p32, %p33
    %p35 = scmp.ne.s32.totalorder %s24, %s25
    %p36 = scmp.eq.s32.totalorder %s16, 0
    %p37 = por %p35, %p36
    %p38 = scmp.ne.s32.totalorder %s24, %s25
    %p39 = scmp.eq.s32.totalorder %s17, 1
    %p40 = por %p38, %p39
    %p42 = scmp.ne.s32.totalorder %s25, %s41
    %p43 = scmp.eq.s32.totalorder %s17, 0
    %p44 = por %p42, %p43
    %s46 = sadd.s32 %s45, 1
    %p49 = scmp.eq.s32.totalorder %s11, 1
    %p50 = scmp.ne.s32.totalorder %s45, %s47
    %p51 = scmp.eq.s32.totalorder %s11, 0
    %p52 = por %p50, %p51
    %p53 = scmp.ne.s32.totalorder %s45, %s47
    %p54 = scmp.eq.s32.totalorder %s16, 1
    %p55 = por %p53, %p54
    %p56 = scmp.ne.s32.totalorder %s47, %s48
    %p57 = scmp.eq.s32.totalorder %s16, 0
    %p58 = por %p56, %p57
    %p59 = scmp.ne.s32.totalorder %s47, %s48
    %p60 = scmp.eq.s32.totalorder %s17, 1
    %p61 = por %p59, %p60
    %p63 = scmp.ne.s32.totalorder %s48, %s62
    %p64 = scmp.eq.s32.totalorder %s17, 0
    %p65 = por %p63, %p64
    %s67 = sadd.s32 %s66, 1
    %p70 = scmp.eq.s32.totalorder %s11, 1
    %p71 = scmp.ne.s32.totalorder %s66, %s68
    %p72 = scmp.eq.s32.totalorder %s11, 0
    %p73 = por %p71, %p72
    %p74 = scmp.ne.s32.totalorder %s66, %s68
    %p75 = scmp.eq.s32.totalorder %s16, 1
    %p76 = por %p74, %p75
    %p77 = scmp.ne.s32.totalorder %s68, %s69
    %p78 = scmp.eq.s32.totalorder %s16, 0
    %p79 = por %p77, %p78
    %p80 = scmp.ne.s32.totalorder %s68, %s69
    %p81 = scmp.eq.s32.totalorder %s17, 1
    %p82 = por %p80, %p81
    %p84 = scmp.ne.s32.totalorder %s69, %s83
    %p85 = scmp.eq.s32.totalorder %s17, 0
    %p86 = por %p84, %p85
    %s88 = sadd.s32 %s87, 1
    %p91 = scmp.eq.s32.totalorder %s11, 1
    %p92 = scmp.ne.s32.totalorder %s87, %s89
    %p93 = scmp.eq.s32.totalorder %s11, 0
    %p94 = por %p92, %p93
    %p95 = scmp.ne.s32.totalorder %s87, %s89
    %p96 = scmp.eq.s32.totalorder %s16, 1
    %p97 = por %p95, %p96
    %p98 = scmp.ne.s32.totalorder %s89, %s90
    %p99 = scmp.eq.s32.totalorder %s16, 0
    %p100 = por %p98, %p99
    %p101 = scmp.ne.s32.totalorder %s89, %s90
    %p102 = scmp.eq.s32.totalorder %s17, 1
    %p103 = por %p101, %p102
    %p105 = scmp.ne.s32.totalorder %s90, %s104
    %p106 = scmp.eq.s32.totalorder %s17, 0
    %p107 = por %p105, %p106
    %s109 = sadd.s32 %s108, 1
    %p112 = scmp.eq.s32.totalorder %s11, 1
    %p113 = scmp.ne.s32.totalorder %s108, %s110
    %p114 = scmp.eq.s32.totalorder %s11, 0
    %p115 = por %p113, %p114
    %p116 = scmp.ne.s32.totalorder %s108, %s110
    %p117 = scmp.eq.s32.totalorder %s16, 1
    %p118 = por %p116, %p117
    %p119 = scmp.ne.s32.totalorder %s110, %s111
    %p120 = scmp.eq.s32.totalorder %s16, 0
    %p121 = por %p119, %p120
    %p122 = scmp.ne.s32.totalorder %s110, %s111
    %p123 = scmp.eq.s32.totalorder %s17, 1
    %p124 = por %p122, %p123
    %p126 = scmp.ne.s32.totalorder %s111, %s125
    %p127 = scmp.eq.s32.totalorder %s17, 0
    %p128 = por %p126, %p127
    %s129 = ssub.s32 %s11, %s18
    %p130 = scmp.eq.s32.totalorder %s129, 0
    %s132 = sadd.s32 %s131, 1
    %s133 = scalar_select %p130, %s131, %s132
    %p136 = pneg %p130
    %p137 = scmp.eq.s32.totalorder %s11, 1
    %p138 = por %p136, %p137
    %p139 = scmp.ne.s32.totalorder %s131, %s134
    %p140 = scmp.eq.s32.totalorder %s11, 0
    %p141 = por %p139, %p140
    %p142 = scmp.ne.s32.totalorder %s131, %s134
    %p143 = scmp.eq.s32.totalorder %s16, 1
    %p144 = por %p142, %p143
    %p145 = scmp.ne.s32.totalorder %s134, %s135
    %p146 = scmp.eq.s32.totalorder %s16, 0
    %p147 = por %p145, %p146
    %p148 = scmp.ne.s32.totalorder %s134, %s135
    %p149 = scmp.eq.s32.totalorder %s17, 1
    %p150 = por %p148, %p149
    %p152 = scmp.ne.s32.totalorder %s135, %s151
    %p153 = scmp.eq.s32.totalorder %s17, 0
    %p154 = por %p152, %p153
    %p155 = scmp.le.s32.totalorder 1, %s11
    %p156 = scmp.lt.s32.totalorder %s11, 3
    %p157 = pnand %p155, %p156
    %p158 = pneg %p157
    // Predicated region
    $region9: #{_policy_forward_impl.1} parent=5 // pred_check
      _
    $region10: #{_policy_forward_impl.1} parent=5 // pred_check_branch
      %160 = sbr.rel (%p157) target = $region12
    $region11: #{_policy_forward_impl.1} parent=5 // pred_region
      %s161 = ssub.s32 %s11, 1
      // Predicated region
      $region13: #{_policy_forward_impl.1} parent=11 // pred_check
        %p162 = pneg %p58
      $region14: #{_policy_forward_impl.1} parent=11 // pred_check_branch
        %164 = sbr.rel (%p162) target = $region16
      $region15: #{_policy_forward_impl.1} parent=11 // pred_region
        _
      $region16: #{_policy_forward_impl.1} parent=11 // pred_fallthru
        _
      // Predicated region
      $region17: #{_policy_forward_impl.1} parent=11 // pred_check
        %p165 = pneg %p79
      $region18: #{_policy_forward_impl.1} parent=11 // pred_check_branch
        %167 = sbr.rel (%p165) target = $region20
      $region19: #{_policy_forward_impl.1} parent=11 // pred_region
        _
      $region20: #{_policy_forward_impl.1} parent=11 // pred_fallthru
        _
      // Predicated region
      $region21: #{_policy_forward_impl.1} parent=11 // pred_check
        %p168 = pneg %p100
      $region22: #{_policy_forward_impl.1} parent=11 // pred_check_branch
        %170 = sbr.rel (%p168) target = $region24
      $region23: #{_policy_forward_impl.1} parent=11 // pred_region
        _
      $region24: #{_policy_forward_impl.1} parent=11 // pred_fallthru
        _
      // Predicated region
      $region25: #{_policy_forward_impl.1} parent=11 // pred_check
        %p171 = pneg %p121
      $region26: #{_policy_forward_impl.1} parent=11 // pred_check_branch
        %173 = sbr.rel (%p171) target = $region28
      $region27: #{_policy_forward_impl.1} parent=11 // pred_region
        _
      $region28: #{_policy_forward_impl.1} parent=11 // pred_fallthru
        _
    $region12: #{_policy_forward_impl.1} parent=5 // pred_fallthru
      _
    %p174 = scmp.lt.s32.totalorder %s11, 2
    // Predicated region
    $region29: #{_policy_forward_impl.1} parent=5 // pred_check
      %p175 = pneg %p174
    $region30: #{_policy_forward_impl.1} parent=5 // pred_check_branch
      %177 = sbr.rel (%p175) target = $region32
    $region31: #{_policy_forward_impl.1} parent=5 // pred_region
      // Predicated region
      $region33: #{_policy_forward_impl.1} parent=31 // pred_check
        %p178 = pneg %p31
      $region34: #{_policy_forward_impl.1} parent=31 // pred_check_branch
        %180 = sbr.rel (%p178) target = $region36
      $region35: #{_policy_forward_impl.1} parent=31 // pred_region
        %s181 = smul.u32 3, %s11
        %p182 = scmp.lt.s32.totalorder %s181, 5
        %s183 = scalar_select %p182, %s181, 5
        %s184 = smul.addr %s183, 8
        %s185 = scalar_lea.vmem %s0, %s184
        %s186 = smul.u32 3, %s11
      $region36: #{_policy_forward_impl.1} parent=31 // pred_fallthru
        _
    $region32: #{_policy_forward_impl.1} parent=5 // pred_fallthru
      _
    %p187 = scmp.le.s32.totalorder 1, %s11
    %p188 = scmp.lt.s32.totalorder %s11, 3
    %p189 = pnand %p187, %p188
    %p190 = pneg %p189
    // Predicated region
    $region37: #{_policy_forward_impl.1} parent=5 // pred_check
      _
    $region38: #{_policy_forward_impl.1} parent=5 // pred_check_branch
      %192 = sbr.rel (%p189) target = $region40
    $region39: #{_policy_forward_impl.1} parent=5 // pred_region
      %s193 = ssub.s32 %s11, 1
      %s194 = smul.u32 3, %s16
      %p195 = scmp.lt.s32.totalorder %s194, 5
      %s196 = scalar_select %p195, %s194, 5
      %s197 = smul.addr %s196, 8
      %s198 = scalar_lea.vmem %s0, %s197
      %p199 = pneg %p37
      %p200 = pneg %p34
      %p201 = pneg %p58
      %p202 = pneg %p55
      %p203 = pneg %p79
      %p204 = pneg %p76
      %p205 = pneg %p100
      %p206 = pneg %p97
      %p207 = pneg %p121
      %p208 = pneg %p118
      %p209 = pneg %p147
      %p210 = pneg %p144
      %s211 = smul.u32 3, %s16
      %p212 = scmp.lt.s32.totalorder %s211, 5
      %s213 = scalar_select %p212, %s211, 5
      %s214 = smul.addr %s213, 8
      %s215 = scalar_lea.vmem %s5, %s214
      %s216 = smul.u32 3, %s16
      %p217 = scmp.lt.s32.totalorder %s216, 5
      %s218 = scalar_select %p217, %s216, 5
      %s219 = smul.addr %s218, 8
      %s220 = scalar_lea.vmem %s0, %s219
      %s221 = smul.u32 3, %s16
      %s222 = smul.u32 3, %s16
      %p223 = scmp.lt.s32.totalorder %s222, 5
      %s224 = scalar_select %p223, %s222, 5
      %s225 = smul.addr %s224, 8
      %s226 = scalar_lea.vmem %s5, %s225
      %s227 = smul.u32 3, %s16
      %v228 = vld [vmem:[%s220] sm:$0xff]
      %v229 = vld [vmem:[%s220 + $0x8] sm:$0xff]
      %v230 = vld [vmem:[%s220 + $0x10] sm:$0xff]
      %v231 = vld [vmem:[%s1] sm:$0xf]
      %v232 = vld [vmem:[%s2] sm:$0x1]
      %v234 = vperm.slane %v232, 0
      %237 = vset.pattern.permute.xlu0 0
      %238 = vperm.xlu0 %237, %v228
      %v239 = vpop.permute.xlu0 %238
      %242 = vset.pattern.permute.xlu0 0
      %243 = vperm.xlu0 %242, %v229
      %v244 = vpop.permute.xlu0 %243
      %247 = vset.pattern.permute.xlu0 0
      %248 = vperm.xlu0 %247, %v230
      %v249 = vpop.permute.xlu0 %248
      %v251 = vperm.slane %v231, 0
      %v252 = vmul.f32 %v239, %v251
      %v253 = vmul.f32 %v244, %v251
      %v254 = vmul.f32 %v249, %v251
      %v255 = vadd.f32 %v234, %v252
      %v256 = vadd.f32 %v234, %v253
      %v257 = vadd.f32 %v234, %v254
      %258 = vset.pattern.permute.xlu0 1
      %259 = vperm.xlu0 %258, %v228
      %v260 = vpop.permute.xlu0 %259
      %262 = vset.pattern.permute.xlu0 1
      %263 = vperm.xlu0 %262, %v229
      %v264 = vpop.permute.xlu0 %263
      %266 = vset.pattern.permute.xlu0 1
      %267 = vperm.xlu0 %266, %v230
      %v268 = vpop.permute.xlu0 %267
      %v270 = vperm.slane %v231, 1
      %v271 = vmul.f32 %v260, %v270
      %v272 = vmul.f32 %v264, %v270
      %v273 = vmul.f32 %v268, %v270
      %v274 = vadd.f32 %v255, %v271
      %v275 = vadd.f32 %v256, %v272
      %v276 = vadd.f32 %v257, %v273
      %277 = vset.pattern.permute.xlu0 2
      %278 = vperm.xlu0 %277, %v228
      %v279 = vpop.permute.xlu0 %278
      %281 = vset.pattern.permute.xlu0 2
      %282 = vperm.xlu0 %281, %v229
      %v283 = vpop.permute.xlu0 %282
      %285 = vset.pattern.permute.xlu0 2
      %286 = vperm.xlu0 %285, %v230
      %v287 = vpop.permute.xlu0 %286
      %v289 = vperm.slane %v231, 2
      %v290 = vmul.f32 %v279, %v289
      %v291 = vmul.f32 %v283, %v289
      %v292 = vmul.f32 %v287, %v289
      %v293 = vadd.f32 %v274, %v290
      %v294 = vadd.f32 %v275, %v291
      %v295 = vadd.f32 %v276, %v292
      %296 = vset.pattern.permute.xlu0 3
      %297 = vperm.xlu0 %296, %v228
      %v298 = vpop.permute.xlu0 %297
      %300 = vset.pattern.permute.xlu0 3
      %301 = vperm.xlu0 %300, %v229
      %v302 = vpop.permute.xlu0 %301
      %304 = vset.pattern.permute.xlu0 3
      %305 = vperm.xlu0 %304, %v230
      %v306 = vpop.permute.xlu0 %305
      %v308 = vperm.slane %v231, 3
      %v309 = vmul.f32 %v298, %v308
      %v310 = vmul.f32 %v302, %v308
      %v311 = vmul.f32 %v306, %v308
      %v312 = vadd.f32 %v293, %v309
      %v313 = vadd.f32 %v294, %v310
      %v314 = vadd.f32 %v295, %v311
      %v315 = vmax.f32 %v312, 0.0
      %v316 = vmax.f32 %v313, 0.0
      %v317 = vmax.f32 %v314, 0.0
      %v318 = vld [vmem:[%s3] sm:$0xff]
      %v319 = vld [vmem:[%s3 + $0x8] sm:$0xff]
      %v320 = vld [vmem:[%s3 + $0x10] sm:$0xff]
      %v321 = vld [vmem:[%s3 + $0x18] sm:$0xff]
      %v322 = vld [vmem:[%s3 + $0x20] sm:$0xff]
      %v323 = vld [vmem:[%s3 + $0x28] sm:$0xff]
      %v324 = vld [vmem:[%s3 + $0x30] sm:$0xff]
      %v325 = vld [vmem:[%s3 + $0x38] sm:$0xff]
      %v326 = vld [vmem:[%s3 + $0x40] sm:$0xff]
      %v327 = vld [vmem:[%s3 + $0x48] sm:$0xff]
      %v328 = vld [vmem:[%s3 + $0x50] sm:$0xff]
      %v329 = vld [vmem:[%s3 + $0x58] sm:$0xff]
      %v330 = vld [vmem:[%s3 + $0x60] sm:$0xff]
      %v331 = vld [vmem:[%s3 + $0x68] sm:$0xff]
      %v332 = vld [vmem:[%s3 + $0x70] sm:$0xff]
      %v333 = vld [vmem:[%s3 + $0x78] sm:$0xff]
      %v334 = vld [vmem:[%s4] sm:$0x1]
      %v336 = vperm.slane %v334, 0
      %338 = vmatpush.msra.mxu0 %v333
      %339 = vmatpush.msra.mxu0 %v332
      %340 = vmatpush.msra.mxu0 %v331
      %341 = vmatpush.msra.mxu0 %v330
      %342 = vmatpush.msra.mxu0 %v329
      %343 = vmatpush.msra.mxu0 %v328
      %344 = vmatpush.msra.mxu0 %v327
      %345 = vmatpush.msra.mxu0 %v326
      %346 = vmatpush.msra.mxu0 %v325
      %347 = vmatpush.msra.mxu0 %v324
      %348 = vmatpush.msra.mxu0 %v323
      %349 = vmatpush.msra.mxu0 %v322
      %350 = vmatpush.msra.mxu0 %v321
      %351 = vmatpush.msra.mxu0 %v320
      %352 = vmatpush.msra.mxu0 %v319
      %353 = vmatpush.msra.mxu0 %v318
      %354 = vmatmul.f32.gmra.mxu0 %v315
      %v355 = vpop.f32.mrf.mxu0
      %v356 = vadd.f32 %v336, %v355
      %357 = vmatmul.f32.gmra.mxu0 %v316
      %v358 = vpop.f32.mrf.mxu0
      %v359 = vadd.f32 %v336, %v358
      %360 = vmatmul.f32.gmra.mxu0 %v317
      %v361 = vpop.f32.mrf.mxu0
      %v362 = vadd.f32 %v336, %v361
      %363 = vdwg.mxu0
      %364 = vmax.xlane.f32.xlu0 %v356
      %v365 = vpop.xlane.xlu0 %364
      %366 = vmax.xlane.f32.xlu0 %v359
      %v367 = vpop.xlane.xlu0 %366
      %368 = vmax.xlane.f32.xlu0 %v362
      %v369 = vpop.xlane.xlu0 %368
      %v370 = vsub.f32 %v356, %v365
      %v371 = vsub.f32 %v359, %v367
      %v372 = vsub.f32 %v362, %v369
      %v373 = vmul.f32 %v370, 1.442695
      %v374 = vpow.pop %v373
      %v375 = vmul.f32 %v371, 1.442695
      %v376 = vpow.pop %v375
      %v377 = vmul.f32 %v372, 1.442695
      %v378 = vpow.pop %v377
      %379 = vadd.xlane.f32.xlu0 %v374
      %v380 = vpop.xlane.xlu0 %379
      %381 = vadd.xlane.f32.xlu0 %v376
      %v382 = vpop.xlane.xlu0 %381
      %383 = vadd.xlane.f32.xlu0 %v378
      %v384 = vpop.xlane.xlu0 %383
      %v385 = vrcp.pop %v380
      %v386 = vmul.f32 %v380, %v385
      %v387 = vsub.f32 1.0, %v386
      %v388 = vmul.f32 %v385, %v387
      %v389 = vadd.f32 %v385, %v388
      %vm390 = vweird.f32 %v380
      %vm391 = vweird.f32 %v385
      %vm392 = vmor %vm390, %vm391
      %v393 = vsel %vm392, %v385, %v389
      %v394 = vand.u32 2147483647, %v380
      %vm395 = vcmp.eq.f32.partialorder %v394, 8.507059e+37
      %v396 = vand.u32 %v380, 2147483648
      %v397 = vor.u32 1.1754944e-38, %v396
      %v398 = vsel %vm395, %v397, %v393
      %v399 = vrcp.pop %v382
      %v400 = vmul.f32 %v382, %v399
      %v401 = vsub.f32 1.0, %v400
      %v402 = vmul.f32 %v399, %v401
      %v403 = vadd.f32 %v399, %v402
      %vm404 = vweird.f32 %v382
      %vm405 = vweird.f32 %v399
      %vm406 = vmor %vm404, %vm405
      %v407 = vsel %vm406, %v399, %v403
      %v408 = vand.u32 2147483647, %v382
      %vm409 = vcmp.eq.f32.partialorder %v408, 8.507059e+37
      %v410 = vand.u32 %v382, 2147483648
      %v411 = vor.u32 1.1754944e-38, %v410
      %v412 = vsel %vm409, %v411, %v407
      %v413 = vrcp.pop %v384
      %v414 = vmul.f32 %v384, %v413
      %v415 = vsub.f32 1.0, %v414
      %v416 = vmul.f32 %v413, %v415
      %v417 = vadd.f32 %v413, %v416
      %vm418 = vweird.f32 %v384
      %vm419 = vweird.f32 %v413
      %vm420 = vmor %vm418, %vm419
      %v421 = vsel %vm420, %v413, %v417
      %v422 = vand.u32 2147483647, %v384
      %vm423 = vcmp.eq.f32.partialorder %v422, 8.507059e+37
      %v424 = vand.u32 %v384, 2147483648
      %v425 = vor.u32 1.1754944e-38, %v424
      %v426 = vsel %vm423, %v425, %v421
      %v427 = vmul.f32 %v374, %v398
      %v428 = vmul.f32 %v376, %v412
      %v429 = vmul.f32 %v378, %v426
      %430 = vst [vmem:[%s226] sm:$0xff] %v427
      %431 = vst [vmem:[%s226 + $0x8] sm:$0xff] %v428
      %432 = vst [vmem:[%s226 + $0x10] sm:$0xff] %v429
      %s433 = smul.u32 3, %s16
      %p434 = scmp.lt.s32.totalorder %s433, 5
      %s435 = scalar_select %p434, %s433, 5
      %s436 = smul.addr %s435, 8
      %s437 = scalar_lea.vmem %s5, %s436
      // Predicated region
      $region41: #{_policy_forward_impl.1} parent=39 // pred_check
        %p438 = pneg %p144
      $region42: #{_policy_forward_impl.1} parent=39 // pred_check_branch
        %440 = sbr.rel (%p438) target = $region44
      $region43: #{_policy_forward_impl.1} parent=39 // pred_region
        %s441 = smul.u32 3, %s16
      $region44: #{_policy_forward_impl.1} parent=39 // pred_fallthru
        _
    $region40: #{_policy_forward_impl.1} parent=5 // pred_fallthru
      _
    %p442 = scmp.le.s32.totalorder 2, %s11
    // Predicated region
    $region45: #{_policy_forward_impl.1} parent=5 // pred_check
      %p443 = pneg %p442
    $region46: #{_policy_forward_impl.1} parent=5 // pred_check_branch
      %445 = sbr.rel (%p443) target = $region48
    $region47: #{_policy_forward_impl.1} parent=5 // pred_region
      %s446 = ssub.s32 %s11, 2
      // Predicated region
      $region49: #{_policy_forward_impl.1} parent=47 // pred_check
        %p447 = pneg %p150
      $region50: #{_policy_forward_impl.1} parent=47 // pred_check_branch
        %449 = sbr.rel (%p447) target = $region52
      $region51: #{_policy_forward_impl.1} parent=47 // pred_region
        %s450 = smul.u32 3, %s17
        %p451 = scmp.lt.s32.totalorder %s450, 5
        %s452 = scalar_select %p451, %s450, 5
        %s453 = smul.addr %s452, 8
        %s454 = scalar_lea.vmem %s5, %s453
      $region52: #{_policy_forward_impl.1} parent=47 // pred_fallthru
        _
    $region48: #{_policy_forward_impl.1} parent=5 // pred_fallthru
      _
  $region6: #{_policy_forward_impl.1} parent=0 // loop_footer
    %s15 = sadd.s32 1, %s11
  $region7: #{_policy_forward_impl.1} parent=0 // loop_footer_branch
    %10 = sbr.rel target = $region3
  $region8: #{_policy_forward_impl.1} parent=0 // loop_exit
    _

</llo_original>
